<compile_context>
chip_gen: v7x
topology: tpu7x:2x2x1
jax: 0.10.0
libtpu: 0.0.40
codegen_flags: <defaults>
</compile_context>

<pallas_src>
import functools

import numpy as np
import jax
import jax.numpy as jnp
from jax.experimental import pallas as pl
from jax.experimental.pallas import tpu as pltpu


def _pos_encoding_kernel(tab_ref, out_ref, *, pack, tile_rows):
    """Fill one (tile_rows, width) block of the (row-packed) encoding table."""
    tm = out_ref.shape[0]
    # Host-baked, float64-derived per-lane constants (see _lane_table).
    inv_freq = tab_ref[0:1, :]     # (1, width): 10000 ** (-2i / d_model)
    lane_bias = tab_ref[1:2, :]    # (1, width): sub_pos * inv_freq + phase

    # Position of lane-group 0 for every row of this tile (exact int math).
    row0 = pl.program_id(0) * tile_rows
    local = jax.lax.broadcasted_iota(jnp.int32, (tm, 1), 0)
    pos = ((row0 + local) * pack).astype(jnp.float32)          # (tm, 1)

    # One mul + one add + one transcendental per element; the even/odd
    # sin/cos split is folded into lane_bias via sin(x) == cos(x - pi/2).
    out_ref[...] = jnp.cos(pos * inv_freq + lane_bias).astype(out_ref.dtype)


def _lane_table(d_model: int, pack: int, width: int) -> np.ndarray:
    """(2, width) f32 per-lane constants, derived in float64 on the host."""
    lane = np.arange(width, dtype=np.int64)
    col = lane % d_model                                   # output column
    sub_pos = (lane // d_model).astype(np.float64)         # packed pos offset
    two_i = (col - (col % 2)).astype(np.float64)           # even index pair
    inv_freq = np.power(10000.0, -two_i / d_model)         # float64 pow
    phase = np.where((col % 2) == 0, -np.pi / 2.0, 0.0)    # sin(x)=cos(x-pi/2)
    lane_bias = sub_pos * inv_freq + phase
    return np.stack([inv_freq, lane_bias]).astype(np.float32)


def _tile_budget_bytes() -> int:
    """Per-tile VMEM budget for the double-buffered output block."""
    try:
        phys = getattr(pltpu.get_tpu_info(), "vmem_capacity_bytes", None)
    except Exception:  # no TPU visible / interpret mode
        phys = None
    if phys is not None and phys >= 96 * 1024 * 1024:
        return 12 * 1024 * 1024        # v5e / v6e: 128 MiB physical VMEM
    return 8 * 1024 * 1024             # v7x (64 MiB physical) or unknown


def _choose_tile_rows(rows: int, width: int, itemsize: int, budget: int) -> int:
    tm = max(1, budget // (width * itemsize))
    tm = min(tm, rows)
    # Give the "parallel" row axis >= 2 grid steps for any table worth
    # splitting, so v7x's 2 TensorCores both work (neutral on v5e/v6e).
    if rows >= 16:
        half = ((pl.cdiv(rows, 2) + 7) // 8) * 8
        tm = min(tm, half)
    if tm < rows:
        tm = max(8, (tm // 8) * 8)     # sublane-aligned when actually tiling
    else:
        tm = rows                      # full extent is always a legal block dim
    return tm


def make_positional_encoding(max_len: int, d_model: int,
                             dtype=jnp.float32) -> jnp.ndarray:
    """Build the (max_len, d_model) sinusoid table with a Pallas kernel.

    All math stays in f32 inside the kernel; `dtype` only affects the stored
    table (pass jnp.bfloat16 to halve HBM writeback if the model can take it).
    """
    if d_model < 128 and 128 % d_model == 0:
        pack = 128 // d_model          # lane-dense small-width path
    else:
        pack = 1
    padded_len = pl.cdiv(max_len, pack) * pack
    rows = padded_len // pack
    width = pack * d_model if pack > 1 else pl.cdiv(d_model, 128) * 128

    tab = jnp.asarray(_lane_table(d_model, pack, width))
    itemsize = int(np.dtype(dtype).itemsize)
    budget = _tile_budget_bytes()
    tm = _choose_tile_rows(rows, width, itemsize, budget)
    grid = pl.cdiv(rows, tm)

    kernel = functools.partial(_pos_encoding_kernel, pack=pack, tile_rows=tm)
    packed = pl.pallas_call(
        kernel,
        out_shape=jax.ShapeDtypeStruct((rows, width), dtype),
        grid=(grid,),
        in_specs=[pl.BlockSpec((2, width), lambda i: (0, 0))],
        out_specs=pl.BlockSpec((tm, width), lambda i: (i, 0)),
        compiler_params=pltpu.CompilerParams(
            dimension_semantics=("parallel",),
            vmem_limit_bytes=2 * budget + (4 << 20)),
        cost_estimate=pl.CostEstimate(
            flops=2 * rows * width,
            transcendentals=rows * width,
            bytes_accessed=rows * width * itemsize + 2 * width * 4),
    )(tab)

    # Free row-major un-pack, then drop row / column padding (if any).
    enc = packed.reshape(padded_len, width // pack)
    return enc[:max_len, :d_model]


# Init-time constant: build the table once per (max_len, d_model, dtype).
get_positional_encoding = functools.lru_cache(maxsize=None)(make_positional_encoding)


def positional_encoding_forward(x: jnp.ndarray, encoding: jnp.ndarray) -> jnp.ndarray:
    """PositionalEncoding.forward: x is (batch, seq_len) -> (seq_len, d_model)."""
    _, seq_len = x.shape
    return encoding[:seq_len, :]


def _reference_table(max_len: int, d_model: int) -> np.ndarray:
    """float64 numpy reference mirroring the PyTorch __init__ math."""
    pos = np.arange(max_len, dtype=np.float64)[:, None]
    two_i = np.arange(0, d_model, 2, dtype=np.float64)
    denom = np.power(10000.0, two_i / d_model)
    ref = np.zeros((max_len, d_model), dtype=np.float64)
    ref[:, 0::2] = np.sin(pos / denom)
    ref[:, 1::2] = np.cos(pos / denom)
    return ref


def _tolerance(max_len: int) -> float:
    # Arguments reach ~max_len; any f32 evaluation (PyTorch's f32 table
    # included) carries a few ulps of that argument, i.e. ~max_len * eps_f32.
    return 1e-5 + 1e-6 * max_len


if __name__ == "__main__":
    # --- small config matching the module's forward (batch, seq_len) ---------
    d_model, max_len = 32, 16
    batch_size, seq_len = 2, 8

    key = jax.random.PRNGKey(0)
    # x is only used for its shape (batch, seq_len) in the reference module.
    x = jax.random.normal(key, (batch_size, seq_len), dtype=jnp.float32)

    encoding = get_positional_encoding(max_len, d_model)
    out = jax.block_until_ready(positional_encoding_forward(x, encoding))
    ref = _reference_table(max_len, d_model)[:seq_len, :]
    assert out.shape == (seq_len, d_model), out.shape
    assert out.dtype == jnp.float32, out.dtype
    assert np.allclose(np.asarray(out, np.float64), ref,
                       atol=_tolerance(max_len)), "mismatch (small / packed)"

    # --- tiled-grid path: pack == 1, >= 2 grid steps, lane-dense width -------
    d2, L2 = 256, 2048
    enc2 = jax.block_until_ready(make_positional_encoding(L2, d2))
    assert enc2.shape == (L2, d2)
    assert np.allclose(np.asarray(enc2, np.float64), _reference_table(L2, d2),
                       atol=_tolerance(L2)), "mismatch (tiled)"

    # --- column padding (d_model neither divisor nor multiple of 128) + a
    #     partial final row-tile --------------------------------------------
    d3, L3 = 48, 100
    enc3 = jax.block_until_ready(make_positional_encoding(L3, d3))
    assert enc3.shape == (L3, d3)
    assert np.allclose(np.asarray(enc3, np.float64), _reference_table(L3, d3),
                       atol=_tolerance(L3)), "mismatch (col-padded)"

    # --- row padding on the packed path (max_len % (128 // d_model) != 0) ----
    d4, L4 = 32, 10
    enc4 = jax.block_until_ready(make_positional_encoding(L4, d4))
    assert enc4.shape == (L4, d4)
    assert np.allclose(np.asarray(enc4, np.float64), _reference_table(L4, d4),
                       atol=_tolerance(L4)), "mismatch (row-padded)"

    print("KERNEL_OK")
</pallas_src>

<mosaic_0001>
module attributes {stable_mosaic.version = 11 : i64} {
  func.func @_pos_encoding_kernel(%arg0: i32, %arg1: memref<2x128xf32, #tpu.memory_space<vmem>>, %arg2: memref<4x128xf32, #tpu.memory_space<vmem>>) attributes {dimension_semantics = [#tpu.dimension_semantics<parallel>], iteration_bounds = array<i64: 1>, scalar_prefetch = 0 : i64, scratch_operands = 0 : i64, tpu.core_type = #tpu.core_type<tc>, window_params = [{pipeline_mode = #tpu.pipeline_mode<synchronous>, transform_indices = @transform_0, window_bounds = array<i64: 2, 128>}, {transform_indices = @transform_1, window_bounds = array<i64: 4, 128>}]} {
    %c0 = arith.constant 0 : index
    %c0_0 = arith.constant 0 : index
    %0 = vector.load %arg1[%c0, %c0_0] : memref<2x128xf32, #tpu.memory_space<vmem>>, vector<1x128xf32>
    %c1 = arith.constant 1 : index
    %c0_1 = arith.constant 0 : index
    %1 = vector.load %arg1[%c1, %c0_1] : memref<2x128xf32, #tpu.memory_space<vmem>>, vector<1x128xf32>
    %c4_i32 = arith.constant 4 : i32
    %2 = arith.muli %arg0, %c4_i32 : i32
    %3 = tpu.iota {dimensions = array<i32: 0>} : vector<4x1xi32>
    %4 = vector.broadcast %2 : i32 to vector<4x1xi32>
    %5 = arith.addi %4, %3 : vector<4x1xi32>
    %c4_i32_2 = arith.constant 4 : i32
    %6 = vector.broadcast %c4_i32_2 : i32 to vector<4x1xi32>
    %7 = arith.muli %5, %6 : vector<4x1xi32>
    %8 = arith.sitofp %7 : vector<4x1xi32> to vector<4x1xf32>
    %9 = vector.broadcast %8 : vector<4x1xf32> to vector<4x128xf32>
    %10 = vector.broadcast %0 : vector<1x128xf32> to vector<4x128xf32>
    %11 = arith.mulf %9, %10 : vector<4x128xf32>
    %12 = vector.broadcast %1 : vector<1x128xf32> to vector<4x128xf32>
    %13 = arith.addf %11, %12 : vector<4x128xf32>
    %14 = math.cos %13 : vector<4x128xf32>
    %c0_3 = arith.constant 0 : index
    %c0_4 = arith.constant 0 : index
    %15 = vector.load %arg2[%c0_3, %c0_4] : memref<4x128xf32, #tpu.memory_space<vmem>>, vector<4x128xf32>
    tpu.vector_store %arg2[%c0_3, %c0_4], %14 {strides = array<i32>} : memref<4x128xf32, #tpu.memory_space<vmem>>, vector<4x128xf32>,
    return
  }
  func.func @transform_0(%arg0: i32) -> (i32, i32) {
    %c0_i32 = arith.constant 0 : i32
    %c0_i32_0 = arith.constant 0 : i32
    %c0_i32_1 = arith.constant 0 : i32
    return %c0_i32, %c0_i32_0 : i32, i32
  }
  func.func @transform_1(%arg0: i32) -> (i32, i32) {
    %c0_i32 = arith.constant 0 : i32
    %c0_i32_0 = arith.constant 0 : i32
    return %arg0, %c0_i32 : i32, i32
  }
}

</mosaic_0001>

<llo_original>
// kernel: tpu_custom_call.1
$region0: #{tpu_custom_call.1}
  #allocation0 [shape = 'u32[]', space=smem, size = 0x4, offset = 0x4, fixed_abs, tag = 'smem constant byte address 0x4 - core index']
  #allocation1 [shape = 'u32[144,128]{1,0:T(1,128)}', space=vmem, size = 0x12000, scoped, tag = 'internal scratch']
  %s0 = inlined_call_operand.hbm [shape: f32[2,128], index: 0, kind: input, shape index: {}]
  %s1 = inlined_call_operand.hbm [shape: f32[4,128], index: 1, kind: output, shape index: {}]
  %s2 = sld [smem:[#allocation0]]
  $region18: #{tpu_custom_call.1} parent=0
    _
  %s4 = ssub.s32 1, %s2
  %s5 = scalar_select 0, %s4, %s2
  $region1: #{tpu_custom_call.1} parent=0
    #allocation2 [shape = 'u8[1024]{0}', space=vmem, size = 0x400, scoped, tag = 'input window, operand 0, single buffered']
    #allocation3 [shape = 's32[1]{0}', space=sflag, size = 0x4, scoped, tag = 'scoped memory for tpu_custom_call.1']
    #allocation4 [shape = 's32[1]{0}', space=sflag, size = 0x4, scoped, tag = 'scoped memory for tpu_custom_call.1']
    #allocation5 [shape = 'u8[2048]{0}', space=vmem, size = 0x800, scoped, tag = 'output window, operand 0, single buffered']
    %6 = vsyncpa [#allocation3], 0
    %7 = vsyncpa [#allocation4], 0
    // Predicated region
    $region2: #{tpu_custom_call.1} parent=1 // pred_check
      _
    $region3: #{tpu_custom_call.1} parent=1 // pred_check_branch
      %9 = sbr.rel (0) target = $region5
    $region4: #{tpu_custom_call.1} parent=1 // pred_region
      %s11 = ssub.s32 32, 32
      %12 = vsyncadd [#allocation3], %s11
      %s14 = sshll.u32 [#allocation2], 4
      %s15 = int_to_ptr.vmem [resolvable:$true] %s14
      %17 = dma.hbm_to_vmem [thread:$0]  %s0, 32, %s15, [#allocation3]
    $region5: #{tpu_custom_call.1} parent=1 // pred_fallthru
      _
    // Predicated region
    $region6: #{tpu_custom_call.1} parent=1 // pred_check
      _
    $region7: #{tpu_custom_call.1} parent=1 // pred_check_branch
      %19 = sbr.rel (0) target = $region9
    $region8: #{tpu_custom_call.1} parent=1 // pred_region
      %20 = dma.done [#allocation3], 32
    $region9: #{tpu_custom_call.1} parent=1 // pred_fallthru
      _
    %v21 = vld [vmem:[#allocation2] sm:$0x1]
    %v22 = vld [vmem:[#allocation2 + $0x1] sm:$0x1]
    %s23 = smul.u32 0, 4
    %v24 = vlaneseq
    %v25 = vshrl.u32 %v24, 7
    %v26 = vstv %s23
    %v27 = vadd.s32 %v26, %v25
    %v28 = vmul.u32 %v27, 4
    %v29 = vcvt.s32.f32 %v28
    %v30 = vlaneseq
    %v31 = vshrl.u32 %v30, 7
    %v32 = vsub.s32 0, %v31
    %v33 = vrot.slane %v21, %v32
    %v34 = vmul.f32 %v29, %v33
    %v35 = vlaneseq
    %v36 = vshrl.u32 %v35, 7
    %v37 = vsub.s32 0, %v36
    %v38 = vrot.slane %v22, %v37
    %v39 = vadd.f32 %v34, %v38
    %v40 = vand.u32 2147483647, %v39
    %vm41 = vcmp.le.f32.partialorder %v40, 0.7853982
    %vm42 = vcmp.lt.s32.totalorder %v39, 0
    %v43 = vand.u32 %v39, 2139095040
    %v44 = vshrl.u32 %v43, 23
    %v45 = vsub.s32 %v44, 127
    %v46 = vand.u32 2147483647, %v39
    %v47 = vand.u32 %v46, 8388607
    %v48 = vor.u32 %v47, 8388608
    %v49 = vsub.s32 0, %v48
    %v50 = vadd.s32 %v45, 1
    %vm51 = vcmp.gt.s32.totalorder %v50, 0
    %v52 = vsel %vm51, %v50, 0
    %v53 = vshrl.u32 %v52, 5
    %v54 = vand.u32 %v52, 31
    %v55 = vsub.s32 32, %v54
    %v56 = vshrl.u32 683565275, %v55
    %v57 = vshll.u32 683565275, %v54
    %v58 = vshrl.u32 2475754826, %v55
    %v59 = vor.u32 %v57, %v58
    %v60 = vshll.u32 2475754826, %v54
    %v61 = vshrl.u32 2131351028, %v55
    %v62 = vor.u32 %v60, %v61
    %v63 = vshll.u32 2131351028, %v54
    %v64 = vshrl.u32 2102212464, %v55
    %v65 = vor.u32 %v63, %v64
    %v66 = vshll.u32 2102212464, %v54
    %v67 = vshrl.u32 920167782, %v55
    %v68 = vor.u32 %v66, %v67
    %v69 = vshll.u32 920167782, %v54
    %v70 = vshrl.u32 1326507024, %v55
    %v71 = vor.u32 %v69, %v70
    %vm72 = vcmp.lt.s32.totalorder %v53, 1
    %vm73 = vcmp.lt.s32.totalorder %v53, 2
    %vm74 = vcmp.lt.s32.totalorder %v53, 3
    %vm75 = vcmp.lt.s32.totalorder %v53, 4
    %v76 = vsel %vm72, %v56, %v59
    %v77 = vsel %vm75, %v65, 2102212464
    %v78 = vsel %vm74, %v62, %v77
    %v79 = vsel %vm73, %v76, %v78
    %v80 = vsel %vm72, %v59, %v62
    %v81 = vsel %vm75, %v68, 920167782
    %v82 = vsel %vm74, %v65, %v81
    %v83 = vsel %vm73, %v80, %v82
    %v84 = vsel %vm72, %v62, %v65
    %v85 = vsel %vm75, %v71, 1326507024
    %v86 = vsel %vm74, %v68, %v85
    %v87 = vsel %vm73, %v84, %v86
    %v88 = vshll.u32 %v48, 8
    %v89 = vmul.u32.u64.compose %v88, %v87
    %v90 = vextract.low.u32 %v89
    %v91 = vextract.high.u32 %v89
    %v92 = vmul.u32.u64.compose %v88, %v83
    %v93 = vextract.low.u32 %v92
    %v94 = vextract.high.u32 %v92
    %v95 = vmul.u32 %v88, %v79
    %v96 = vadd.s32 %v91, %v93
    %vm97 = vc.u32 %v91, %v93
    %v98 = vadd.s32 %v94, 1
    %v99 = vsel %vm97, %v98, %v94
    %v100 = vadd.s32 %v95, %v99
    %v101 = vadd.s32 %v100, 536870912
    %v102 = vshrl.u32 %v101, 30
    %v103 = vshll.u32 %v102, 30
    %v104 = vsub.s32 %v100, %v103
    %vm105 = vcmp.lt.s32.totalorder %v104, 0
    %v106 = vsub.s32 0, %v104
    %v107 = vsel %vm105, %v106, %v104
    %v108 = vclz %v107
    %v109 = vsub.s32 %v108, 2
    %vm110 = vcmp.gt.s32.totalorder 0, %v109
    %v111 = vsel %vm110, 0, %v109
    %v112 = vsub.s32 32, %v111
    %v113 = vshll.u32 %v104, %v111
    %v114 = vshrl.u32 %v96, %v112
    %v115 = vor.u32 %v113, %v114
    %v116 = vsub.s32 4294967266, %v111
    %v117 = vadd.s32 %v116, 127
    %v118 = vshll.u32 %v117, 23
    %v119 = vor.u32 4788187, %v118
    %v120 = vand.u32 2147483647, %v119
    %v122 = vcvt.s32.f32 %v115
    %v123 = vmul.f32 %v122, %v120
    %v124 = vxor.u32 %v123, 2147483648
    %v125 = vsel %vm42, %v124, %v123
    %v126 = vsub.s32 4, %v102
    %v127 = vsel %vm42, %v126, %v102
    %v128 = vsel %vm41, %v39, %v125
    %v129 = vsel %vm41, 0, %v127
    %v130 = vcosq.f32.pop %v128
    %v131 = vsinq.f32.pop %v128
    %vm132 = vweird.f32 %v39
    %v133 = vand.u32 %v129, 3
    %vm134 = vcmp.lt.s32.totalorder %v133, 2
    %vm135 = vcmp.eq.s32.totalorder %v133, 0
    %v136 = vxor.u32 %v131, 2147483648
    %v137 = vsel %vm135, %v130, %v136
    %vm138 = vcmp.eq.s32.totalorder %v133, 2
    %v139 = vxor.u32 %v130, 2147483648
    %v140 = vsel %vm138, %v139, %v131
    %v141 = vsel %vm134, %v137, %v140
    %v142 = vsel %vm132, nan, %v141
    %143 = vst [vmem:[#allocation5] sm:$0xf] %v142
    // Predicated region
    $region10: #{tpu_custom_call.1} parent=1 // pred_check
      _
    $region11: #{tpu_custom_call.1} parent=1 // pred_check_branch
      %145 = sbr.rel (0) target = $region13
    $region12: #{tpu_custom_call.1} parent=1 // pred_region
      %s147 = ssub.s32 64, 64
      %148 = vsyncadd [#allocation4], %s147
      %s150 = sshll.u32 [#allocation5], 4
      %s151 = int_to_ptr.vmem [resolvable:$true] %s150
      %153 = dma.vmem_to_hbm [thread:$0]  %s151, 64, %s1, [#allocation4]
    $region13: #{tpu_custom_call.1} parent=1 // pred_fallthru
      _
    // Predicated region
    $region14: #{tpu_custom_call.1} parent=1 // pred_check
      _
    $region15: #{tpu_custom_call.1} parent=1 // pred_check_branch
      %155 = sbr.rel (0) target = $region17
    $region16: #{tpu_custom_call.1} parent=1 // pred_region
      %156 = dma.done [#allocation4], 64
    $region17: #{tpu_custom_call.1} parent=1 // pred_fallthru
      _
    %157 = vsyncpa [#allocation3], 1
    %158 = vsyncpa [#allocation4], 1

</llo_original>
